<compile_context>
chip_gen: v7x
topology: tpu7x:2x2x1
jax: 0.10.0
libtpu: 0.0.40
codegen_flags: <defaults>
</compile_context>

<pallas_src>
import functools

import jax
import jax.numpy as jnp
from jax.experimental import pallas as pl
from jax.experimental.pallas import tpu as pltpu

_INV_SQRT2 = 0.7071067811865476
_SQRT_2_OVER_PI = 0.7978845608028654


def _gelu(x, approx):
    if approx:
        # tanh approximation: transcendental lands on the (otherwise idle) EUP
        # instead of a long VALU erf polynomial.  ~1e-3 divergence from PyTorch.
        return 0.5 * x * (1.0 + jnp.tanh(_SQRT_2_OVER_PI * (x + 0.044715 * x * x * x)))
    # PyTorch F.gelu default = exact (erf-based) GELU.
    return 0.5 * x * (1.0 + jax.lax.erf(x * _INV_SQRT2))


def ffn_kernel(x_ref, w_in_ref, wo_ref, wo_rs_ref, o_ref, *,
               inner_p, inv_inner, eps, approx_gelu):
    # x_ref:     (dim, tl)          channel-first tile, L on lanes
    # w_in_ref:  (2*inner_p, dim)   stacked proj_in weight [w_a; w_gate], zero-padded rows
    # wo_ref:    (dim, inner_p)     proj_out weight with LayerNorm gain folded in,
    #                               zero-padded columns
    # wo_rs_ref: (dim, 1)           rowsum of wo (f32), precomputed in the wrapper
    w_dtype = w_in_ref.dtype
    x = x_ref[...]
    if x.dtype != w_dtype:
        x = x.astype(w_dtype)

    # proj_in (1x1 conv == channel matmul): single stacked MXU dot; split at a
    # sublane-aligned (multiple-of-8) offset -> tile-aligned, no relayout.
    h = jnp.dot(w_in_ref[...], x, preferred_element_type=jnp.float32)   # (2*inner_p, tl)
    a = h[:inner_p, :]
    gate = h[inner_p:, :]

    # GEGLU.  Padded channels are exactly zero (zero weight rows -> a = gate = 0).
    u = a * _gelu(gate, approx_gelu)                                     # (inner_p, tl) f32

    # ChanLayerNorm statistics over the true channel count, one pass.
    s1 = jnp.sum(u, axis=0, keepdims=True)                               # (1, tl)
    s2 = jnp.sum(u * u, axis=0, keepdims=True)                           # (1, tl)
    mean = s1 * inv_inner
    var = s2 * inv_inner - mean * mean
    # PyTorch: var.clamp(min=eps).rsqrt()  ==  rsqrt(max(var, eps)).
    r = jax.lax.rsqrt(jnp.maximum(var, eps))                             # (1, tl)

    # proj_out on the UN-normalized u; LayerNorm (gain already folded into wo)
    # applied algebraically after the matmul:
    #   wo @ ((u - mean) * r) == r * (wo @ u) - rowsum(wo) * (mean * r)
    # No (inner_p, tl) normalized intermediate; the dot is independent of s1/s2.
    u_mm = u if u.dtype == wo_ref.dtype else u.astype(wo_ref.dtype)
    y = jnp.dot(wo_ref[...], u_mm, preferred_element_type=jnp.float32)   # (dim, tl)
    out = y * r - wo_rs_ref[...] * (mean * r)
    o_ref[...] = out.astype(o_ref.dtype)


def prepare_ffn_params(w_in, g, w_out, *, mxu_dtype=jnp.bfloat16):
    """One-time weight prep (do this at parameter-load time, NOT per call).

    w_in:  (2*inner, dim)  proj_in Conv1d weight (kernel-size-1 squeezed)
    g:     (inner,)        ChanLayerNorm gain
    w_out: (dim, inner)    proj_out Conv1d weight (kernel-size-1 squeezed)
    mxu_dtype: dtype for the MXU operands (bf16 default; works on v5e/v6e/v7x).
               None keeps exact f32 matmuls.
    """
    inner2, dim = w_in.shape
    inner = inner2 // 2
    assert w_out.shape == (dim, inner), (w_out.shape, dim, inner)
    assert g.shape == (inner,), g.shape

    # Hidden width padded to a sublane-friendly multiple; stats use true inner.
    inner_p = ((inner + 7) // 8) * 8

    w_a = w_in[:inner, :]                        # (inner, dim)
    w_g = w_in[inner:, :]                        # (inner, dim)
    wo = w_out * g[None, :]                      # fold LN gain: (n*g)@W == n@(W*g)
    wo_rowsum = jnp.sum(wo, axis=1, keepdims=True).astype(jnp.float32)  # (dim, 1)

    if inner_p != inner:
        pad = inner_p - inner
        w_a = jnp.pad(w_a, ((0, pad), (0, 0)))
        w_g = jnp.pad(w_g, ((0, pad), (0, 0)))
        wo = jnp.pad(wo, ((0, 0), (0, pad)))
    w_stacked = jnp.concatenate([w_a, w_g], axis=0)   # (2*inner_p, dim)

    if mxu_dtype is not None:
        w_stacked = w_stacked.astype(mxu_dtype)
        wo = wo.astype(mxu_dtype)

    return dict(w_stacked=w_stacked, wo=wo, wo_rowsum=wo_rowsum,
                dim=dim, inner=inner, inner_p=inner_p)


def _vmem_limit_bytes():
    cap = 64 * 1024 * 1024                       # conservative default (v7x per-TC)
    try:
        cap = int(pltpu.get_tpu_info().vmem_capacity_bytes)
    except Exception:
        pass
    # 48 MiB on v7x (64 MiB physical), 96 MiB on v5e/v6e (128 MiB physical).
    return int(min(cap * 3 // 4, 96 * 1024 * 1024))


def _pick_l_tile(L, B, dim, inner_p, w_itemsize, x_itemsize, budget):
    """Largest lane-dense (multiple-of-128) L tile that fits the VMEM budget,
    while keeping >=2 grid steps when possible (v7x megacore)."""
    if L <= 128:
        return L                                  # full-extent tile
    weight_bytes = 3 * inner_p * dim * w_itemsize + dim * 4   # single-buffered
    def step_bytes(t):
        io = 4 * dim * t * x_itemsize             # double-buffered in + out tiles
        live = (3 * inner_p + dim + 16) * t * 4   # h + u + y + small f32 temps
        return weight_bytes + io + live
    for t in (2048, 1024, 512, 256, 128):
        if t > L or step_bytes(t) > budget:
            continue
        if t == 128 or B * ((L + t - 1) // t) >= 2:
            return t
    return 128


def feedforward_pallas(x_ncl, params, *, approx_gelu=False):
    """x_ncl: (B, dim, L) in PyTorch NCL layout; params from prepare_ffn_params."""
    B, dim, L = x_ncl.shape
    assert dim == params["dim"], (dim, params["dim"])
    inner, inner_p = params["inner"], params["inner_p"]
    w_stacked, wo, wo_rowsum = params["w_stacked"], params["wo"], params["wo_rowsum"]

    # eps follows the ChanLayerNorm dtype rule (its input dtype == x dtype here).
    eps = 1e-5 if x_ncl.dtype == jnp.float32 else 1e-3

    w_itemsize = jnp.dtype(w_stacked.dtype).itemsize
    x_itemsize = jnp.dtype(x_ncl.dtype).itemsize

    vmem_limit = _vmem_limit_bytes()
    tl = _pick_l_tile(L, B, dim, inner_p, w_itemsize, x_itemsize,
                      budget=int(vmem_limit * 0.85))
    grid = (B, pl.cdiv(L, tl))

    cost = pl.CostEstimate(
        flops=6 * B * L * dim * inner,            # proj_in (2x) + proj_out (1x) matmuls
        transcendentals=B * L * inner,            # one erf/tanh per hidden element
        bytes_accessed=(2 * B * dim * L * x_itemsize
                        + 3 * inner_p * dim * w_itemsize + dim * 4),
    )

    kernel = functools.partial(ffn_kernel, inner_p=inner_p,
                               inv_inner=1.0 / inner, eps=eps,
                               approx_gelu=approx_gelu)

    return pl.pallas_call(
        kernel,
        out_shape=jax.ShapeDtypeStruct((B, dim, L), x_ncl.dtype),
        grid_spec=pltpu.PrefetchScalarGridSpec(
            num_scalar_prefetch=0,
            grid=grid,
            in_specs=[
                # batch dim squeezed out of the kernel view -> (dim, tl)
                pl.BlockSpec((None, dim, tl), lambda b, l: (b, 0, l)),
                # resident, constant-index weights: never re-fetched, so single-buffer
                pl.BlockSpec((2 * inner_p, dim), lambda b, l: (0, 0),
                             pipeline_mode=pl.Buffered(1)),
                pl.BlockSpec((dim, inner_p), lambda b, l: (0, 0),
                             pipeline_mode=pl.Buffered(1)),
                pl.BlockSpec((dim, 1), lambda b, l: (0, 0),
                             pipeline_mode=pl.Buffered(1)),
            ],
            out_specs=pl.BlockSpec((None, dim, tl), lambda b, l: (b, 0, l)),
        ),
        compiler_params=pltpu.CompilerParams(
            dimension_semantics=("parallel", "parallel"),
            vmem_limit_bytes=vmem_limit,
        ),
        cost_estimate=cost,
    )(x_ncl, w_stacked, wo, wo_rowsum)


def feedforward_reference(x_ncl, w_in, g, w_out):
    """Plain-JAX reference mirroring the PyTorch forward (channel-first)."""
    h = jnp.einsum('oc,bcl->bol', w_in, x_ncl)
    inner = h.shape[1] // 2
    a, gate = h[:, :inner, :], h[:, inner:, :]
    u = a * _gelu(gate, approx=False)
    eps = 1e-5 if u.dtype == jnp.float32 else 1e-3
    mean = jnp.mean(u, axis=1, keepdims=True)
    var = jnp.mean((u - mean) ** 2, axis=1, keepdims=True)
    normed = (u - mean) * jax.lax.rsqrt(jnp.maximum(var, eps)) * g[None, :, None]
    return jnp.einsum('oc,bcl->bol', w_out, normed)


if __name__ == "__main__":
    B, dim, L = 2, 24, 16
    mult = 4
    inner = int(dim * mult * 2 / 3)  # 64

    key = jax.random.PRNGKey(0)
    kx, k1, k2, k3 = jax.random.split(key, 4)
    x = jax.random.normal(kx, (B, dim, L), dtype=jnp.float32)
    # proj_in Conv1d(dim, inner*2, 1, bias=False) weight -> (inner*2, dim)
    w_in = 0.05 * jax.random.normal(k1, (inner * 2, dim), dtype=jnp.float32)
    # ChanLayerNorm gain (ones-init in PyTorch); perturbed for a nontrivial test
    g = 1.0 + 0.1 * jax.random.normal(k2, (inner,), dtype=jnp.float32)
    # proj_out Conv1d(inner, dim, 1, bias=False) weight -> (dim, inner)
    # NOTE: PyTorch zero-inits this weight; random here so the output is nontrivial.
    w_out = 0.05 * jax.random.normal(k3, (dim, inner), dtype=jnp.float32)

    ref = feedforward_reference(x, w_in, g, w_out)

    # Exact-f32 path: tight parity with the PyTorch math.
    params_f32 = prepare_ffn_params(w_in, g, w_out, mxu_dtype=None)
    out_f32 = jax.block_until_ready(feedforward_pallas(x, params_f32))
    assert out_f32.shape == (B, dim, L), out_f32.shape
    assert jnp.allclose(out_f32, ref, atol=1e-4, rtol=1e-4), (
        float(jnp.max(jnp.abs(out_f32 - ref))))

    # Default bf16-MXU path (f32 accumulation + f32 elementwise math).
    params_bf16 = prepare_ffn_params(w_in, g, w_out)   # mxu_dtype=bf16 default
    out_bf16 = jax.block_until_ready(feedforward_pallas(x, params_bf16))
    assert jnp.allclose(out_bf16, ref, atol=5e-2, rtol=5e-2), (
        float(jnp.max(jnp.abs(out_bf16 - ref))))

    # Ragged L (not a multiple of the 128-lane tile): exercises the masked last
    # tile (no wrapper pad/slice) and the padded-inner (85 -> 88) path.
    B2, dim2, L2 = 1, 32, 200
    inner2 = int(dim2 * mult * 2 / 3)  # 85
    kx2, k4, k5, k6 = jax.random.split(jax.random.PRNGKey(1), 4)
    x2 = jax.random.normal(kx2, (B2, dim2, L2), dtype=jnp.float32)
    w_in2 = 0.05 * jax.random.normal(k4, (inner2 * 2, dim2), dtype=jnp.float32)
    g2 = 1.0 + 0.1 * jax.random.normal(k5, (inner2,), dtype=jnp.float32)
    w_out2 = 0.05 * jax.random.normal(k6, (dim2, inner2), dtype=jnp.float32)
    params2 = prepare_ffn_params(w_in2, g2, w_out2, mxu_dtype=None)
    out2 = jax.block_until_ready(feedforward_pallas(x2, params2))
    ref2 = feedforward_reference(x2, w_in2, g2, w_out2)
    assert out2.shape == (B2, dim2, L2), out2.shape
    assert jnp.allclose(out2, ref2, atol=1e-4, rtol=1e-4), (
        float(jnp.max(jnp.abs(out2 - ref2))))

    print("KERNEL_OK")
</pallas_src>

<mosaic_0001>
module attributes {stable_mosaic.version = 11 : i64} {
  func.func @ffn_kernel(%arg0: i32, %arg1: i32, %arg2: memref<1x24x16xf32, #tpu.memory_space<vmem>>, %arg3: memref<128x24xf32, #tpu.memory_space<vmem>>, %arg4: memref<24x64xf32, #tpu.memory_space<vmem>>, %arg5: memref<24x1xf32, #tpu.memory_space<vmem>>, %arg6: memref<1x24x16xf32, #tpu.memory_space<vmem>>) attributes {dimension_semantics = [#tpu.dimension_semantics<parallel>, #tpu.dimension_semantics<parallel>], iteration_bounds = array<i64: 2, 1>, scalar_prefetch = 0 : i64, scratch_operands = 0 : i64, tpu.core_type = #tpu.core_type<tc>, window_params = [{transform_indices = @transform_0, window_bounds = array<i64: 1, 24, 16>}, {pipeline_mode = #tpu.pipeline_mode<synchronous>, transform_indices = @transform_1, window_bounds = array<i64: 128, 24>}, {pipeline_mode = #tpu.pipeline_mode<synchronous>, transform_indices = @transform_2, window_bounds = array<i64: 24, 64>}, {pipeline_mode = #tpu.pipeline_mode<synchronous>, transform_indices = @transform_3, window_bounds = array<i64: 24, 1>}, {transform_indices = @transform_4, window_bounds = array<i64: 1, 24, 16>}]} {
    %c0 = arith.constant 0 : index
    %c0_0 = arith.constant 0 : index
    %c0_1 = arith.constant 0 : index
    %0 = vector.load %arg2[%c0, %c0_0, %c0_1] : memref<1x24x16xf32, #tpu.memory_space<vmem>>, vector<1x24x16xf32>
    %1 = vector.shape_cast %0 : vector<1x24x16xf32> to vector<24x16xf32>
    %c0_2 = arith.constant 0 : index
    %c0_3 = arith.constant 0 : index
    %2 = vector.load %arg3[%c0_2, %c0_3] : memref<128x24xf32, #tpu.memory_space<vmem>>, vector<128x24xf32>
    %cst = arith.constant dense<0.000000e+00> : vector<128x16xf32>
    %3 = tpu.matmul %2, %1, %cst {dimension_numbers = #tpu.dot_dimension_numbers<[1], [0], [0], [1], [0, 0, 1, 1], [], []>} : vector<128x24xf32>, vector<24x16xf32>, vector<128x16xf32> -> vector<128x16xf32>
    %4 = vector.extract_strided_slice %3 {offsets = [0, 0], sizes = [64, 16], strides = [1, 1]} : vector<128x16xf32> to vector<64x16xf32>
    %5 = vector.extract_strided_slice %3 {offsets = [64, 0], sizes = [64, 16], strides = [1, 1]} : vector<128x16xf32> to vector<64x16xf32>
    %cst_4 = arith.constant 5.000000e-01 : f32
    %6 = vector.broadcast %cst_4 : f32 to vector<64x16xf32>
    %7 = arith.mulf %6, %5 : vector<64x16xf32>
    %cst_5 = arith.constant 0.707106769 : f32
    %8 = vector.broadcast %cst_5 : f32 to vector<64x16xf32>
    %9 = arith.mulf %5, %8 : vector<64x16xf32>
    %10 = math.erf %9 : vector<64x16xf32>
    %cst_6 = arith.constant 1.000000e+00 : f32
    %11 = vector.broadcast %cst_6 : f32 to vector<64x16xf32>
    %12 = arith.addf %11, %10 : vector<64x16xf32>
    %13 = arith.mulf %7, %12 : vector<64x16xf32>
    %14 = arith.mulf %4, %13 : vector<64x16xf32>
    %cst_7 = arith.constant dense<0.000000e+00> : vector<16xf32>
    %15 = vector.multi_reduction <add>, %14, %cst_7 [0] : vector<64x16xf32> to vector<16xf32>
    %16 = vector.shape_cast %15 : vector<16xf32> to vector<1x16xf32>
    %17 = arith.mulf %14, %14 : vector<64x16xf32>
    %cst_8 = arith.constant dense<0.000000e+00> : vector<16xf32>
    %18 = vector.multi_reduction <add>, %17, %cst_8 [0] : vector<64x16xf32> to vector<16xf32>
    %19 = vector.shape_cast %18 : vector<16xf32> to vector<1x16xf32>
    %cst_9 = arith.constant 1.562500e-02 : f32
    %20 = vector.broadcast %cst_9 : f32 to vector<1x16xf32>
    %21 = arith.mulf %16, %20 : vector<1x16xf32>
    %cst_10 = arith.constant 1.562500e-02 : f32
    %22 = vector.broadcast %cst_10 : f32 to vector<1x16xf32>
    %23 = arith.mulf %19, %22 : vector<1x16xf32>
    %24 = arith.mulf %21, %21 : vector<1x16xf32>
    %25 = arith.subf %23, %24 : vector<1x16xf32>
    %cst_11 = arith.constant 9.99999974E-6 : f32
    %26 = vector.broadcast %cst_11 : f32 to vector<1x16xf32>
    %27 = arith.maximumf %25, %26 : vector<1x16xf32>
    %28 = math.rsqrt %27 : vector<1x16xf32>
    %c0_12 = arith.constant 0 : index
    %c0_13 = arith.constant 0 : index
    %29 = vector.load %arg4[%c0_12, %c0_13] : memref<24x64xf32, #tpu.memory_space<vmem>>, vector<24x64xf32>
    %cst_14 = arith.constant dense<0.000000e+00> : vector<24x16xf32>
    %30 = tpu.matmul %29, %14, %cst_14 {dimension_numbers = #tpu.dot_dimension_numbers<[1], [0], [0], [1], [0, 0, 1, 1], [], []>} : vector<24x64xf32>, vector<64x16xf32>, vector<24x16xf32> -> vector<24x16xf32>
    %31 = vector.broadcast %28 : vector<1x16xf32> to vector<24x16xf32>
    %32 = arith.mulf %30, %31 : vector<24x16xf32>
    %c0_15 = arith.constant 0 : index
    %c0_16 = arith.constant 0 : index
    %33 = vector.load %arg5[%c0_15, %c0_16] : memref<24x1xf32, #tpu.memory_space<vmem>>, vector<24x1xf32>
    %34 = arith.mulf %21, %28 : vector<1x16xf32>
    %35 = vector.broadcast %33 : vector<24x1xf32> to vector<24x16xf32>
    %36 = vector.broadcast %34 : vector<1x16xf32> to vector<24x16xf32>
    %37 = arith.mulf %35, %36 : vector<24x16xf32>
    %38 = arith.subf %32, %37 : vector<24x16xf32>
    %c0_17 = arith.constant 0 : index
    %c0_18 = arith.constant 0 : index
    %c0_19 = arith.constant 0 : index
    %39 = vector.load %arg6[%c0_17, %c0_18, %c0_19] : memref<1x24x16xf32, #tpu.memory_space<vmem>>, vector<1x24x16xf32>
    %40 = vector.shape_cast %39 : vector<1x24x16xf32> to vector<24x16xf32>
    %41 = vector.shape_cast %38 : vector<24x16xf32> to vector<1x24x16xf32>
    tpu.vector_store %arg6[%c0_17, %c0_18, %c0_19], %41 {strides = array<i32>} : memref<1x24x16xf32, #tpu.memory_space<vmem>>, vector<1x24x16xf32>,
    return
  }
  func.func @transform_0(%arg0: i32, %arg1: i32) -> (i32, i32, i32) {
    %c0_i32 = arith.constant 0 : i32
    %c0_i32_0 = arith.constant 0 : i32
    return %arg0, %c0_i32, %arg1 : i32, i32, i32
  }
  func.func @transform_1(%arg0: i32, %arg1: i32) -> (i32, i32) {
    %c0_i32 = arith.constant 0 : i32
    %c0_i32_0 = arith.constant 0 : i32
    %c0_i32_1 = arith.constant 0 : i32
    return %c0_i32, %c0_i32_0 : i32, i32
  }
  func.func @transform_2(%arg0: i32, %arg1: i32) -> (i32, i32) {
    %c0_i32 = arith.constant 0 : i32
    %c0_i32_0 = arith.constant 0 : i32
    %c0_i32_1 = arith.constant 0 : i32
    return %c0_i32, %c0_i32_0 : i32, i32
  }
  func.func @transform_3(%arg0: i32, %arg1: i32) -> (i32, i32) {
    %c0_i32 = arith.constant 0 : i32
    %c0_i32_0 = arith.constant 0 : i32
    %c0_i32_1 = arith.constant 0 : i32
    return %c0_i32, %c0_i32_0 : i32, i32
  }
  func.func @transform_4(%arg0: i32, %arg1: i32) -> (i32, i32, i32) {
    %c0_i32 = arith.constant 0 : i32
    %c0_i32_0 = arith.constant 0 : i32
    return %arg0, %c0_i32, %arg1 : i32, i32, i32
  }
}

</mosaic_0001>

<llo_original>
// kernel: tpu_custom_call.1
$region0: #{tpu_custom_call.1}
  #allocation0 [shape = 'u32[]', space=smem, size = 0x4, offset = 0x4, fixed_abs, tag = 'smem constant byte address 0x4 - core index']
  #allocation1 [shape = 'u32[144,128]{1,0:T(1,128)}', space=vmem, size = 0x12000, scoped, tag = 'internal scratch']
  %s0 = inlined_call_operand.vmem [shape: f32[2,24,16], index: 0, kind: input, shape index: {}]
  %s1 = inlined_call_operand.vmem [shape: f32[128,24], index: 1, kind: input, shape index: {}]
  %s2 = inlined_call_operand.vmem [shape: f32[24,64], index: 2, kind: input, shape index: {}]
  %s3 = inlined_call_operand.vmem [shape: f32[24,1], index: 3, kind: input, shape index: {}]
  %s4 = inlined_call_operand.vmem [shape: f32[2,24,16], index: 4, kind: output, shape index: {}]
  %s5 = sld [smem:[#allocation0]]
  $region49: #{tpu_custom_call.1} parent=0
    _
  %s7 = ssub.s32 1, %s5
  %s8 = scalar_select 0, %s7, %s5
  loop: start=0, step=1, limit=4
  $region2: #{tpu_custom_call.1} parent=0 // loop_pre_header
    _
  $region3: #{tpu_custom_call.1} parent=0 // loop_header
    %s10 = sphi 0, %s14
    %p11 = scmp.ge.s32.totalorder %s10, 4
    %s17 = sphi 0, %s29
    %s18 = sphi 0, %s25
    %s19 = sphi 0, %s17
    %s20 = sphi 0, %s18
    %s21 = sphi 0, %s19
    %s22 = sphi 0, %s20
    %s34 = sphi 0, %s36
    %s37 = sphi 0, %s34
    %s38 = sphi 0, %s37
    %s54 = sphi 0, %s38
    %s58 = sphi 0, %s58
    %s60 = sphi 0, %s58
    %s61 = sphi 0, %s60
    %s75 = sphi 0, %s61
    %s79 = sphi 0, %s79
    %s81 = sphi 0, %s79
    %s82 = sphi 0, %s81
    %s96 = sphi 0, %s82
    %s100 = sphi 0, %s100
    %s102 = sphi 0, %s100
    %s103 = sphi 0, %s102
    %s117 = sphi 0, %s103
    %s125 = sphi 0, %s127
    %s128 = sphi 0, %s125
    %s129 = sphi 0, %s128
    %s145 = sphi 0, %s129
  $region4: #{tpu_custom_call.1} parent=0 // loop_header_branch
    %13 = sbr.rel (%p11) target = $region8
  $region5: #{tpu_custom_call.1} parent=0 // loop_body
    %s15 = ssub.s32 %s10, 1
    %s16 = ssub.s32 %s10, 2
    %s23 = sadd.s32 1, %s18
    %p24 = scmp.ge.s32.totalorder %s23, 1
    %s25 = scalar_select %p24, 0, %s23
    %s26 = sadd.s32 1, %s17
    %s27 = scalar_select %p24, %s26, %s17
    %p28 = scmp.ge.s32.totalorder %s27, 2
    %s29 = scalar_select %p28, 0, %s27
    %s30 = ssub.s32 %s17, %s29
    %s31 = ssub.s32 %s18, %s25
    %s32 = sor.u32 %s30, %s31
    %p33 = scmp.eq.s32.totalorder %s32, 0
    %s35 = sadd.s32 %s34, 1
    %s36 = scalar_select %p33, %s34, %s35
    %p39 = pneg %p33
    %p40 = scmp.eq.s32.totalorder %s10, 1
    %p41 = por %p39, %p40
    %p42 = scmp.ne.s32.totalorder %s34, %s37
    %p43 = scmp.eq.s32.totalorder %s10, 0
    %p44 = por %p42, %p43
    %p45 = scmp.ne.s32.totalorder %s34, %s37
    %p46 = scmp.eq.s32.totalorder %s15, 1
    %p47 = por %p45, %p46
    %p48 = scmp.ne.s32.totalorder %s37, %s38
    %p49 = scmp.eq.s32.totalorder %s15, 0
    %p50 = por %p48, %p49
    %p51 = scmp.ne.s32.totalorder %s37, %s38
    %p52 = scmp.eq.s32.totalorder %s16, 1
    %p53 = por %p51, %p52
    %p55 = scmp.ne.s32.totalorder %s38, %s54
    %p56 = scmp.eq.s32.totalorder %s16, 0
    %p57 = por %p55, %p56
    %s59 = sadd.s32 %s58, 1
    %p62 = scmp.eq.s32.totalorder %s10, 1
    %p63 = scmp.ne.s32.totalorder %s58, %s60
    %p64 = scmp.eq.s32.totalorder %s10, 0
    %p65 = por %p63, %p64
    %p66 = scmp.ne.s32.totalorder %s58, %s60
    %p67 = scmp.eq.s32.totalorder %s15, 1
    %p68 = por %p66, %p67
    %p69 = scmp.ne.s32.totalorder %s60, %s61
    %p70 = scmp.eq.s32.totalorder %s15, 0
    %p71 = por %p69, %p70
    %p72 = scmp.ne.s32.totalorder %s60, %s61
    %p73 = scmp.eq.s32.totalorder %s16, 1
    %p74 = por %p72, %p73
    %p76 = scmp.ne.s32.totalorder %s61, %s75
    %p77 = scmp.eq.s32.totalorder %s16, 0
    %p78 = por %p76, %p77
    %s80 = sadd.s32 %s79, 1
    %p83 = scmp.eq.s32.totalorder %s10, 1
    %p84 = scmp.ne.s32.totalorder %s79, %s81
    %p85 = scmp.eq.s32.totalorder %s10, 0
    %p86 = por %p84, %p85
    %p87 = scmp.ne.s32.totalorder %s79, %s81
    %p88 = scmp.eq.s32.totalorder %s15, 1
    %p89 = por %p87, %p88
    %p90 = scmp.ne.s32.totalorder %s81, %s82
    %p91 = scmp.eq.s32.totalorder %s15, 0
    %p92 = por %p90, %p91
    %p93 = scmp.ne.s32.totalorder %s81, %s82
    %p94 = scmp.eq.s32.totalorder %s16, 1
    %p95 = por %p93, %p94
    %p97 = scmp.ne.s32.totalorder %s82, %s96
    %p98 = scmp.eq.s32.totalorder %s16, 0
    %p99 = por %p97, %p98
    %s101 = sadd.s32 %s100, 1
    %p104 = scmp.eq.s32.totalorder %s10, 1
    %p105 = scmp.ne.s32.totalorder %s100, %s102
    %p106 = scmp.eq.s32.totalorder %s10, 0
    %p107 = por %p105, %p106
    %p108 = scmp.ne.s32.totalorder %s100, %s102
    %p109 = scmp.eq.s32.totalorder %s15, 1
    %p110 = por %p108, %p109
    %p111 = scmp.ne.s32.totalorder %s102, %s103
    %p112 = scmp.eq.s32.totalorder %s15, 0
    %p113 = por %p111, %p112
    %p114 = scmp.ne.s32.totalorder %s102, %s103
    %p115 = scmp.eq.s32.totalorder %s16, 1
    %p116 = por %p114, %p115
    %p118 = scmp.ne.s32.totalorder %s103, %s117
    %p119 = scmp.eq.s32.totalorder %s16, 0
    %p120 = por %p118, %p119
    %s121 = ssub.s32 %s17, %s29
    %s122 = ssub.s32 %s18, %s25
    %s123 = sor.u32 %s121, %s122
    %p124 = scmp.eq.s32.totalorder %s123, 0
    %s126 = sadd.s32 %s125, 1
    %s127 = scalar_select %p124, %s125, %s126
    %p130 = pneg %p124
    %p131 = scmp.eq.s32.totalorder %s10, 1
    %p132 = por %p130, %p131
    %p133 = scmp.ne.s32.totalorder %s125, %s128
    %p134 = scmp.eq.s32.totalorder %s10, 0
    %p135 = por %p133, %p134
    %p136 = scmp.ne.s32.totalorder %s125, %s128
    %p137 = scmp.eq.s32.totalorder %s15, 1
    %p138 = por %p136, %p137
    %p139 = scmp.ne.s32.totalorder %s128, %s129
    %p140 = scmp.eq.s32.totalorder %s15, 0
    %p141 = por %p139, %p140
    %p142 = scmp.ne.s32.totalorder %s128, %s129
    %p143 = scmp.eq.s32.totalorder %s16, 1
    %p144 = por %p142, %p143
    %p146 = scmp.ne.s32.totalorder %s129, %s145
    %p147 = scmp.eq.s32.totalorder %s16, 0
    %p148 = por %p146, %p147
    %p149 = scmp.le.s32.totalorder 1, %s10
    %p150 = scmp.lt.s32.totalorder %s10, 3
    %p151 = pnand %p149, %p150
    %p152 = pneg %p151
    // Predicated region
    $region9: #{tpu_custom_call.1} parent=5 // pred_check
      _
    $region10: #{tpu_custom_call.1} parent=5 // pred_check_branch
      %154 = sbr.rel (%p151) target = $region12
    $region11: #{tpu_custom_call.1} parent=5 // pred_region
      %s155 = ssub.s32 %s10, 1
      // Predicated region
      $region13: #{tpu_custom_call.1} parent=11 // pred_check
        %p156 = pneg %p71
      $region14: #{tpu_custom_call.1} parent=11 // pred_check_branch
        %158 = sbr.rel (%p156) target = $region16
      $region15: #{tpu_custom_call.1} parent=11 // pred_region
        _
      $region16: #{tpu_custom_call.1} parent=11 // pred_fallthru
        _
      // Predicated region
      $region17: #{tpu_custom_call.1} parent=11 // pred_check
        %p159 = pneg %p92
      $region18: #{tpu_custom_call.1} parent=11 // pred_check_branch
        %161 = sbr.rel (%p159) target = $region20
      $region19: #{tpu_custom_call.1} parent=11 // pred_region
        _
      $region20: #{tpu_custom_call.1} parent=11 // pred_fallthru
        _
      // Predicated region
      $region21: #{tpu_custom_call.1} parent=11 // pred_check
        %p162 = pneg %p113
      $region22: #{tpu_custom_call.1} parent=11 // pred_check_branch
        %164 = sbr.rel (%p162) target = $region24
      $region23: #{tpu_custom_call.1} parent=11 // pred_region
        _
      $region24: #{tpu_custom_call.1} parent=11 // pred_fallthru
        _
    $region12: #{tpu_custom_call.1} parent=5 // pred_fallthru
      _
    %p165 = scmp.lt.s32.totalorder %s10, 2
    // Predicated region
    $region25: #{tpu_custom_call.1} parent=5 // pred_check
      %p166 = pneg %p165
    $region26: #{tpu_custom_call.1} parent=5 // pred_check_branch
      %168 = sbr.rel (%p166) target = $region28
    $region27: #{tpu_custom_call.1} parent=5 // pred_region
      // Predicated region
      $region29: #{tpu_custom_call.1} parent=27 // pred_check
        %p169 = pneg %p44
      $region30: #{tpu_custom_call.1} parent=27 // pred_check_branch
        %171 = sbr.rel (%p169) target = $region32
      $region31: #{tpu_custom_call.1} parent=27 // pred_region
        %p172 = scmp.lt.s32.totalorder %s17, 1
        %s173 = scalar_select %p172, %s17, 1
        %p174 = scmp.lt.s32.totalorder %s18, 0
        %s175 = scalar_select %p174, %s18, 0
        %s176 = smul.addr %s173, 3
        %s177 = sadd.s32 %s175, %s176
        %s178 = smul.addr %s177, 8
        %s179 = scalar_lea.vmem %s0, %s178
      $region32: #{tpu_custom_call.1} parent=27 // pred_fallthru
        _
    $region28: #{tpu_custom_call.1} parent=5 // pred_fallthru
      _
    %p180 = scmp.le.s32.totalorder 1, %s10
    %p181 = scmp.lt.s32.totalorder %s10, 3
    %p182 = pnand %p180, %p181
    %p183 = pneg %p182
    // Predicated region
    $region33: #{tpu_custom_call.1} parent=5 // pred_check
      _
    $region34: #{tpu_custom_call.1} parent=5 // pred_check_branch
      %185 = sbr.rel (%p182) target = $region36
    $region35: #{tpu_custom_call.1} parent=5 // pred_region
      %s186 = ssub.s32 %s10, 1
      %p187 = scmp.lt.s32.totalorder %s19, 1
      %s188 = scalar_select %p187, %s19, 1
      %p189 = scmp.lt.s32.totalorder %s20, 0
      %s190 = scalar_select %p189, %s20, 0
      %s191 = smul.addr %s188, 3
      %s192 = sadd.s32 %s190, %s191
      %s193 = smul.addr %s192, 8
      %s194 = scalar_lea.vmem %s0, %s193
      %p195 = pneg %p50
      %p196 = pneg %p47
      %p197 = pneg %p71
      %p198 = pneg %p68
      %p199 = pneg %p92
      %p200 = pneg %p89
      %p201 = pneg %p113
      %p202 = pneg %p110
      %p203 = pneg %p141
      %p204 = pneg %p138
      %p205 = scmp.lt.s32.totalorder %s19, 1
      %s206 = scalar_select %p205, %s19, 1
      %p207 = scmp.lt.s32.totalorder %s20, 0
      %s208 = scalar_select %p207, %s20, 0
      %s209 = smul.addr %s206, 3
      %s210 = sadd.s32 %s208, %s209
      %s211 = smul.addr %s210, 8
      %s212 = scalar_lea.vmem %s4, %s211
      %p213 = scmp.lt.s32.totalorder %s19, 1
      %s214 = scalar_select %p213, %s19, 1
      %p215 = scmp.lt.s32.totalorder %s20, 0
      %s216 = scalar_select %p215, %s20, 0
      %s217 = smul.addr %s214, 3
      %s218 = sadd.s32 %s216, %s217
      %s219 = smul.addr %s218, 8
      %s220 = scalar_lea.vmem %s0, %s219
      %p221 = scmp.lt.s32.totalorder %s19, 1
      %s222 = scalar_select %p221, %s19, 1
      %p223 = scmp.lt.s32.totalorder %s20, 0
      %s224 = scalar_select %p223, %s20, 0
      %s225 = smul.addr %s222, 3
      %s226 = sadd.s32 %s224, %s225
      %s227 = smul.addr %s226, 8
      %s228 = scalar_lea.vmem %s4, %s227
      %v229 = vld [vmem:[%s220] sm:$0xff]
      %v230 = vld [vmem:[%s220 + $0x8] sm:$0xff]
      %v231 = vld [vmem:[%s220 + $0x10] sm:$0xff]
      %v232 = vld [vmem:[%s1] sm:$0xff]
      %v233 = vld [vmem:[%s1 + $0x8] sm:$0xff]
      %v234 = vld [vmem:[%s1 + $0x10] sm:$0xff]
      %v235 = vld [vmem:[%s1 + $0x18] sm:$0xff]
      %v236 = vld [vmem:[%s1 + $0x20] sm:$0xff]
      %v237 = vld [vmem:[%s1 + $0x28] sm:$0xff]
      %v238 = vld [vmem:[%s1 + $0x30] sm:$0xff]
      %v239 = vld [vmem:[%s1 + $0x38] sm:$0xff]
      %v240 = vld [vmem:[%s1 + $0x40] sm:$0xff]
      %v241 = vld [vmem:[%s1 + $0x48] sm:$0xff]
      %v242 = vld [vmem:[%s1 + $0x50] sm:$0xff]
      %v243 = vld [vmem:[%s1 + $0x58] sm:$0xff]
      %v244 = vld [vmem:[%s1 + $0x60] sm:$0xff]
      %v245 = vld [vmem:[%s1 + $0x68] sm:$0xff]
      %v246 = vld [vmem:[%s1 + $0x70] sm:$0xff]
      %v247 = vld [vmem:[%s1 + $0x78] sm:$0xff]
      %vm248 = vcmask 195584
      %v250 = vsel %vm248, %v232, 0
      %v253 = vsel %vm248, %v233, 0
      %v256 = vsel %vm248, %v234, 0
      %v259 = vsel %vm248, %v235, 0
      %v262 = vsel %vm248, %v236, 0
      %v265 = vsel %vm248, %v237, 0
      %v268 = vsel %vm248, %v238, 0
      %v271 = vsel %vm248, %v239, 0
      %v274 = vsel %vm248, %v240, 0
      %v277 = vsel %vm248, %v241, 0
      %v280 = vsel %vm248, %v242, 0
      %v283 = vsel %vm248, %v243, 0
      %v286 = vsel %vm248, %v244, 0
      %v289 = vsel %vm248, %v245, 0
      %v292 = vsel %vm248, %v246, 0
      %v295 = vsel %vm248, %v247, 0
      %297 = vmatprep.subr.mxu0 0.0
      %298 = vmatpush1.msra.mxu0 %v229
      %299 = vmatprep.subr.mxu0 0.0
      %300 = vmatpush1.msra.mxu0 %v230
      %301 = vmatprep.subr.mxu0 0.0
      %302 = vmatpush1.msra.mxu0 %v231
      %303 = vmatprep.subr.mxu0 0.0
      %304 = vmatpush1.msra.mxu0 0.0
      %305 = vmatprep.subr.mxu0 0.0
      %306 = vmatpush1.msra.mxu0 0.0
      %307 = vmatprep.subr.mxu0 0.0
      %308 = vmatpush1.msra.mxu0 0.0
      %309 = vmatprep.subr.mxu0 0.0
      %310 = vmatpush1.msra.mxu0 0.0
      %311 = vmatprep.subr.mxu0 0.0
      %312 = vmatpush1.msra.mxu0 0.0
      %313 = vmatprep.subr.mxu0 0.0
      %314 = vmatpush1.msra.mxu0 0.0
      %315 = vmatprep.subr.mxu0 0.0
      %316 = vmatpush1.msra.mxu0 0.0
      %317 = vmatprep.subr.mxu0 0.0
      %318 = vmatpush1.msra.mxu0 0.0
      %319 = vmatprep.subr.mxu0 0.0
      %320 = vmatpush1.msra.mxu0 0.0
      %321 = vmatprep.subr.mxu0 0.0
      %322 = vmatpush1.msra.mxu0 0.0
      %323 = vmatprep.subr.mxu0 0.0
      %324 = vmatpush1.msra.mxu0 0.0
      %325 = vmatprep.subr.mxu0 0.0
      %326 = vmatpush1.msra.mxu0 0.0
      %327 = vmatprep.subr.mxu0 0.0
      %328 = vmatpush1.msra.mxu0 0.0
      %329 = vmatprep.subr.mxu0 0.0
      %330 = vmatpush1.msra.mxu0 0.0
      %331 = vmatprep.subr.mxu0 0.0
      %332 = vmatpush1.msra.mxu0 0.0
      %333 = vmatprep.subr.mxu0 0.0
      %334 = vmatpush1.msra.mxu0 0.0
      %335 = vmatprep.subr.mxu0 0.0
      %336 = vmatpush1.msra.mxu0 0.0
      %337 = vmatprep.subr.mxu0 0.0
      %338 = vmatpush1.msra.mxu0 0.0
      %339 = vmatprep.subr.mxu0 0.0
      %340 = vmatpush1.msra.mxu0 0.0
      %341 = vmatprep.subr.mxu0 0.0
      %342 = vmatpush1.msra.mxu0 0.0
      %343 = vmatprep.subr.mxu0 0.0
      %344 = vmatpush1.msra.mxu0 0.0
      %345 = vmatprep.subr.mxu0 0.0
      %346 = vmatpush1.msra.mxu0 0.0
      %347 = vmatprep.subr.mxu0 0.0
      %348 = vmatpush1.msra.mxu0 0.0
      %349 = vmatprep.subr.mxu0 0.0
      %350 = vmatpush1.msra.mxu0 0.0
      %351 = vmatprep.subr.mxu0 0.0
      %352 = vmatpush1.msra.mxu0 0.0
      %353 = vmatprep.subr.mxu0 0.0
      %354 = vmatpush1.msra.mxu0 0.0
      %355 = vmatprep.subr.mxu0 0.0
      %356 = vmatpush1.msra.mxu0 0.0
      %357 = vmatprep.subr.mxu0 0.0
      %358 = vmatpush1.msra.mxu0 0.0
      %359 = vmatprep.subr.mxu0 0.0
      %360 = vmatpush1.msra.mxu0 0.0
      %361 = vmatprep.mubr.f32.mxu0 0.0
      %362 = vmatmul.mubr.f32.gmra.mrb[0].mxu0 %v250
      %v363 = vpop.f32.mrb[0].mxu0
      %v364 = vadd.f32 0.0, %v363
      %v365 = vpop.f32.mrb[0].mxu0
      %366 = vmatprep.mubr.f32.mxu0 0.0
      %367 = vmatmul.mubr.f32.gmra.mrb[0].mxu0 %v253
      %v368 = vpop.f32.mrb[0].mxu0
      %v369 = vadd.f32 0.0, %v368
      %v370 = vpop.f32.mrb[0].mxu0
      %371 = vmatprep.mubr.f32.mxu0 0.0
      %372 = vmatmul.mubr.f32.gmra.mrb[0].mxu0 %v256
      %v373 = vpop.f32.mrb[0].mxu0
      %v374 = vadd.f32 0.0, %v373
      %v375 = vpop.f32.mrb[0].mxu0
      %376 = vmatprep.mubr.f32.mxu0 0.0
      %377 = vmatmul.mubr.f32.gmra.mrb[0].mxu0 %v259
      %v378 = vpop.f32.mrb[0].mxu0
      %v379 = vadd.f32 0.0, %v378
      %v380 = vpop.f32.mrb[0].mxu0
      %381 = vmatprep.mubr.f32.mxu0 0.0
      %382 = vmatmul.mubr.f32.gmra.mrb[0].mxu0 %v262
      %v383 = vpop.f32.mrb[0].mxu0
      %v384 = vadd.f32 0.0, %v383
      %v385 = vpop.f32.mrb[0].mxu0
      %386 = vmatprep.mubr.f32.mxu0 0.0
      %387 = vmatmul.mubr.f32.gmra.mrb[0].mxu0 %v265
      %v388 = vpop.f32.mrb[0].mxu0
      %v389 = vadd.f32 0.0, %v388
      %v390 = vpop.f32.mrb[0].mxu0
      %391 = vmatprep.mubr.f32.mxu0 0.0
      %392 = vmatmul.mubr.f32.gmra.mrb[0].mxu0 %v268
      %v393 = vpop.f32.mrb[0].mxu0
      %v394 = vadd.f32 0.0, %v393
      %v395 = vpop.f32.mrb[0].mxu0
      %396 = vmatprep.mubr.f32.mxu0 0.0
      %397 = vmatmul.mubr.f32.gmra.mrb[0].mxu0 %v271
      %v398 = vpop.f32.mrb[0].mxu0
      %v399 = vadd.f32 0.0, %v398
      %v400 = vpop.f32.mrb[0].mxu0
      %401 = vmatprep.mubr.f32.mxu0 0.0
      %402 = vmatmul.mubr.f32.gmra.mrb[0].mxu0 %v274
      %v403 = vpop.f32.mrb[0].mxu0
      %v404 = vadd.f32 0.0, %v403
      %v405 = vpop.f32.mrb[0].mxu0
      %406 = vmatprep.mubr.f32.mxu0 0.0
      %407 = vmatmul.mubr.f32.gmra.mrb[0].mxu0 %v277
      %v408 = vpop.f32.mrb[0].mxu0
      %v409 = vadd.f32 0.0, %v408
      %v410 = vpop.f32.mrb[0].mxu0
      %411 = vmatprep.mubr.f32.mxu0 0.0
      %412 = vmatmul.mubr.f32.gmra.mrb[0].mxu0 %v280
      %v413 = vpop.f32.mrb[0].mxu0
      %v414 = vadd.f32 0.0, %v413
      %v415 = vpop.f32.mrb[0].mxu0
      %416 = vmatprep.mubr.f32.mxu0 0.0
      %417 = vmatmul.mubr.f32.gmra.mrb[0].mxu0 %v283
      %v418 = vpop.f32.mrb[0].mxu0
      %v419 = vadd.f32 0.0, %v418
      %v420 = vpop.f32.mrb[0].mxu0
      %421 = vmatprep.mubr.f32.mxu0 0.0
      %422 = vmatmul.mubr.f32.gmra.mrb[0].mxu0 %v286
      %v423 = vpop.f32.mrb[0].mxu0
      %v424 = vadd.f32 0.0, %v423
      %v425 = vpop.f32.mrb[0].mxu0
      %426 = vmatprep.mubr.f32.mxu0 0.0
      %427 = vmatmul.mubr.f32.gmra.mrb[0].mxu0 %v289
      %v428 = vpop.f32.mrb[0].mxu0
      %v429 = vadd.f32 0.0, %v428
      %v430 = vpop.f32.mrb[0].mxu0
      %431 = vmatprep.mubr.f32.mxu0 0.0
      %432 = vmatmul.mubr.f32.gmra.mrb[0].mxu0 %v292
      %v433 = vpop.f32.mrb[0].mxu0
      %v434 = vadd.f32 0.0, %v433
      %v435 = vpop.f32.mrb[0].mxu0
      %436 = vmatprep.mubr.f32.mxu0 0.0
      %437 = vmatmul.mubr.f32.gmra.mrb[0].mxu0 %v295
      %v438 = vpop.f32.mrb[0].mxu0
      %v439 = vadd.f32 0.0, %v438
      %v440 = vpop.f32.mrb[0].mxu0
      %441 = vdwg.mxu0
      %v442 = vmul.f32 %v404, 0.5
      %v443 = vmul.f32 %v409, 0.5
      %v444 = vmul.f32 %v414, 0.5
      %v445 = vmul.f32 %v419, 0.5
      %v446 = vmul.f32 %v424, 0.5
      %v447 = vmul.f32 %v429, 0.5
      %v448 = vmul.f32 %v434, 0.5
      %v449 = vmul.f32 %v439, 0.5
      %v450 = vmul.f32 %v404, 0.70710677
      %v451 = vmul.f32 %v409, 0.70710677
      %v452 = vmul.f32 %v414, 0.70710677
      %v453 = vmul.f32 %v419, 0.70710677
      %v454 = vmul.f32 %v424, 0.70710677
      %v455 = vmul.f32 %v429, 0.70710677
      %v456 = vmul.f32 %v434, 0.70710677
      %v457 = vmul.f32 %v439, 0.70710677
      %v458 = verf.f32.pop %v450
      %v459 = verf.f32.pop %v451
      %v460 = verf.f32.pop %v452
      %v461 = verf.f32.pop %v453
      %v462 = verf.f32.pop %v454
      %v463 = verf.f32.pop %v455
      %v464 = verf.f32.pop %v456
      %v465 = verf.f32.pop %v457
      %v466 = vadd.f32 %v458, 1.0
      %v467 = vadd.f32 %v459, 1.0
      %v468 = vadd.f32 %v460, 1.0
      %v469 = vadd.f32 %v461, 1.0
      %v470 = vadd.f32 %v462, 1.0
      %v471 = vadd.f32 %v463, 1.0
      %v472 = vadd.f32 %v464, 1.0
      %v473 = vadd.f32 %v465, 1.0
      %v474 = vmul.f32 %v442, %v466
      %v475 = vmul.f32 %v443, %v467
      %v476 = vmul.f32 %v444, %v468
      %v477 = vmul.f32 %v445, %v469
      %v478 = vmul.f32 %v446, %v470
      %v479 = vmul.f32 %v447, %v471
      %v480 = vmul.f32 %v448, %v472
      %v481 = vmul.f32 %v449, %v473
      %v482 = vmul.f32 %v364, %v474
      %v483 = vmul.f32 %v369, %v475
      %v484 = vmul.f32 %v374, %v476
      %v485 = vmul.f32 %v379, %v477
      %v486 = vmul.f32 %v384, %v478
      %v487 = vmul.f32 %v389, %v479
      %v488 = vmul.f32 %v394, %v480
      %v489 = vmul.f32 %v399, %v481
      %vm490 = vcmask 130048
      %v491 = vsel %vm490, %v482, 0.0
      %v492 = vsel %vm490, %v483, 0.0
      %v493 = vadd.f32 %v491, %v492
      %v494 = vsel %vm490, %v484, 0.0
      %v495 = vadd.f32 %v493, %v494
      %v496 = vsel %vm490, %v485, 0.0
      %v497 = vadd.f32 %v495, %v496
      %v498 = vsel %vm490, %v486, 0.0
      %v499 = vadd.f32 %v497, %v498
      %v500 = vsel %vm490, %v487, 0.0
      %v501 = vadd.f32 %v499, %v500
      %v502 = vsel %vm490, %v488, 0.0
      %v503 = vadd.f32 %v501, %v502
      %v504 = vsel %vm490, %v489, 0.0
      %v505 = vadd.f32 %v503, %v504
      %v506 = vrot.slane %v505, 4
      %v507 = vadd.f32 %v505, %v506
      %v508 = vrot.slane %v507, 2
      %v509 = vadd.f32 %v507, %v508
      %v510 = vrot.slane %v509, 1
      %v511 = vadd.f32 %v509, %v510
      %v512 = vmul.f32 %v482, %v482
      %v513 = vmul.f32 %v483, %v483
      %v514 = vmul.f32 %v484, %v484
      %v515 = vmul.f32 %v485, %v485
      %v516 = vmul.f32 %v486, %v486
      %v517 = vmul.f32 %v487, %v487
      %v518 = vmul.f32 %v488, %v488
      %v519 = vmul.f32 %v489, %v489
      %v520 = vsel %vm490, %v512, 0.0
      %v521 = vsel %vm490, %v513, 0.0
      %v522 = vadd.f32 %v520, %v521
      %v523 = vsel %vm490, %v514, 0.0
      %v524 = vadd.f32 %v522, %v523
      %v525 = vsel %vm490, %v515, 0.0
      %v526 = vadd.f32 %v524, %v525
      %v527 = vsel %vm490, %v516, 0.0
      %v528 = vadd.f32 %v526, %v527
      %v529 = vsel %vm490, %v517, 0.0
      %v530 = vadd.f32 %v528, %v529
      %v531 = vsel %vm490, %v518, 0.0
      %v532 = vadd.f32 %v530, %v531
      %v533 = vsel %vm490, %v519, 0.0
      %v534 = vadd.f32 %v532, %v533
      %v535 = vrot.slane %v534, 4
      %v536 = vadd.f32 %v534, %v535
      %v537 = vrot.slane %v536, 2
      %v538 = vadd.f32 %v536, %v537
      %v539 = vrot.slane %v538, 1
      %v540 = vadd.f32 %v538, %v539
      %v541 = vmul.f32 %v511, 0.015625
      %v542 = vmul.f32 %v540, 0.015625
      %v543 = vmul.f32 %v541, %v541
      %v544 = vsub.f32 %v542, %v543
      %v545 = vmax.f32 %v544, 1e-05
      %v546 = vrsqrt.pop %v545
      %v547 = vld [vmem:[%s2] sm:$0xff]
      %v548 = vld [vmem:[%s2 + $0x8] sm:$0xff]
      %v549 = vld [vmem:[%s2 + $0x10] sm:$0xff]
      %vm550 = vcmask 523264
      %v552 = vsel %vm550, %v547, 0
      %v555 = vsel %vm550, %v548, 0
      %v558 = vsel %vm550, %v549, 0
      %560 = vmatprep.subr.mxu0 0.0
      %561 = vmatpush1.msra.mxu0 %v482
      %562 = vmatprep.subr.mxu0 0.0
      %563 = vmatpush1.msra.mxu0 %v483
      %564 = vmatprep.subr.mxu0 0.0
      %565 = vmatpush1.msra.mxu0 %v484
      %566 = vmatprep.subr.mxu0 0.0
      %567 = vmatpush1.msra.mxu0 %v485
      %568 = vmatprep.subr.mxu0 0.0
      %569 = vmatpush1.msra.mxu0 %v486
      %570 = vmatprep.subr.mxu0 0.0
      %571 = vmatpush1.msra.mxu0 %v487
      %572 = vmatprep.subr.mxu0 0.0
      %573 = vmatpush1.msra.mxu0 %v488
      %574 = vmatprep.subr.mxu0 0.0
      %575 = vmatpush1.msra.mxu0 %v489
      %576 = vmatprep.subr.mxu0 0.0
      %577 = vmatpush1.msra.mxu0 0.0
      %578 = vmatprep.subr.mxu0 0.0
      %579 = vmatpush1.msra.mxu0 0.0
      %580 = vmatprep.subr.mxu0 0.0
      %581 = vmatpush1.msra.mxu0 0.0
      %582 = vmatprep.subr.mxu0 0.0
      %583 = vmatpush1.msra.mxu0 0.0
      %584 = vmatprep.subr.mxu0 0.0
      %585 = vmatpush1.msra.mxu0 0.0
      %586 = vmatprep.subr.mxu0 0.0
      %587 = vmatpush1.msra.mxu0 0.0
      %588 = vmatprep.subr.mxu0 0.0
      %589 = vmatpush1.msra.mxu0 0.0
      %590 = vmatprep.subr.mxu0 0.0
      %591 = vmatpush1.msra.mxu0 0.0
      %592 = vmatprep.subr.mxu0 0.0
      %593 = vmatpush1.msra.mxu0 0.0
      %594 = vmatprep.subr.mxu0 0.0
      %595 = vmatpush1.msra.mxu0 0.0
      %596 = vmatprep.subr.mxu0 0.0
      %597 = vmatpush1.msra.mxu0 0.0
      %598 = vmatprep.subr.mxu0 0.0
      %599 = vmatpush1.msra.mxu0 0.0
      %600 = vmatprep.subr.mxu0 0.0
      %601 = vmatpush1.msra.mxu0 0.0
      %602 = vmatprep.subr.mxu0 0.0
      %603 = vmatpush1.msra.mxu0 0.0
      %604 = vmatprep.subr.mxu0 0.0
      %605 = vmatpush1.msra.mxu0 0.0
      %606 = vmatprep.subr.mxu0 0.0
      %607 = vmatpush1.msra.mxu0 0.0
      %608 = vmatprep.subr.mxu0 0.0
      %609 = vmatpush1.msra.mxu0 0.0
      %610 = vmatprep.subr.mxu0 0.0
      %611 = vmatpush1.msra.mxu0 0.0
      %612 = vmatprep.subr.mxu0 0.0
      %613 = vmatpush1.msra.mxu0 0.0
      %614 = vmatprep.subr.mxu0 0.0
      %615 = vmatpush1.msra.mxu0 0.0
      %616 = vmatprep.subr.mxu0 0.0
      %617 = vmatpush1.msra.mxu0 0.0
      %618 = vmatprep.subr.mxu0 0.0
      %619 = vmatpush1.msra.mxu0 0.0
      %620 = vmatprep.subr.mxu0 0.0
      %621 = vmatpush1.msra.mxu0 0.0
      %622 = vmatprep.subr.mxu0 0.0
      %623 = vmatpush1.msra.mxu0 0.0
      %624 = vmatprep.mubr.f32.mxu0 0.0
      %625 = vmatmul.mubr.f32.gmra.mrb[0].mxu0 %v552
      %v626 = vpop.f32.mrb[0].mxu0
      %v627 = vadd.f32 0.0, %v626
      %v628 = vpop.f32.mrb[0].mxu0
      %629 = vmatprep.mubr.f32.mxu0 0.0
      %630 = vmatmul.mubr.f32.gmra.mrb[0].mxu0 %v555
      %v631 = vpop.f32.mrb[0].mxu0
      %v632 = vadd.f32 0.0, %v631
      %v633 = vpop.f32.mrb[0].mxu0
      %634 = vmatprep.mubr.f32.mxu0 0.0
      %635 = vmatmul.mubr.f32.gmra.mrb[0].mxu0 %v558
      %v636 = vpop.f32.mrb[0].mxu0
      %v637 = vadd.f32 0.0, %v636
      %v638 = vpop.f32.mrb[0].mxu0
      %639 = vdwg.mxu0
      %v640 = vmul.f32 %v627, %v546
      %v641 = vmul.f32 %v632, %v546
      %v642 = vmul.f32 %v637, %v546
      %v643 = vld [vmem:[%s3] sm:$0xff]
      %v644 = vld [vmem:[%s3 + $0x8] sm:$0xff]
      %v645 = vld [vmem:[%s3 + $0x10] sm:$0xff]
      %v646 = vmul.f32 %v541, %v546
      %648 = vset.pattern.permute.xlu0 0
      %649 = vperm.xlu0 %648, %v643
      %v650 = vpop.permute.xlu0 %649
      %653 = vset.pattern.permute.xlu0 0
      %654 = vperm.xlu0 %653, %v644
      %v655 = vpop.permute.xlu0 %654
      %658 = vset.pattern.permute.xlu0 0
      %659 = vperm.xlu0 %658, %v645
      %v660 = vpop.permute.xlu0 %659
      %v662 = vmul.f32 %v650, %v646
      %v663 = vmul.f32 %v655, %v646
      %v664 = vmul.f32 %v660, %v646
      %v665 = vsub.f32 %v640, %v662
      %v666 = vsub.f32 %v641, %v663
      %v667 = vsub.f32 %v642, %v664
      %668 = vst.msk [vmem:[%s228] sm:$0xff] %vm490, %v665
      %669 = vst.msk [vmem:[%s228 + $0x8] sm:$0xff] %vm490, %v666
      %670 = vst.msk [vmem:[%s228 + $0x10] sm:$0xff] %vm490, %v667
      %p671 = scmp.lt.s32.totalorder %s19, 1
      %s672 = scalar_select %p671, %s19, 1
      %p673 = scmp.lt.s32.totalorder %s20, 0
      %s674 = scalar_select %p673, %s20, 0
      %s675 = smul.addr %s672, 3
      %s676 = sadd.s32 %s674, %s675
      %s677 = smul.addr %s676, 8
      %s678 = scalar_lea.vmem %s4, %s677
      // Predicated region
      $region37: #{tpu_custom_call.1} parent=35 // pred_check
        %p679 = pneg %p138
      $region38: #{tpu_custom_call.1} parent=35 // pred_check_branch
        %681 = sbr.rel (%p679) target = $region40
      $region39: #{tpu_custom_call.1} parent=35 // pred_region
        _
      $region40: #{tpu_custom_call.1} parent=35 // pred_fallthru
        _
    $region36: #{tpu_custom_call.1} parent=5 // pred_fallthru
      _
    %p682 = scmp.le.s32.totalorder 2, %s10
    // Predicated region
    $region41: #{tpu_custom_call.1} parent=5 // pred_check
      %p683 = pneg %p682
    $region42: #{tpu_custom_call.1} parent=5 // pred_check_branch
      %685 = sbr.rel (%p683) target = $region44
    $region43: #{tpu_custom_call.1} parent=5 // pred_region
      %s686 = ssub.s32 %s10, 2
      // Predicated region
      $region45: #{tpu_custom_call.1} parent=43 // pred_check
        %p687 = pneg %p144
      $region46: #{tpu_custom_call.1} parent=43 // pred_check_branch
        %689 = sbr.rel (%p687) target = $region48
      $region47: #{tpu_custom_call.1} parent=43 // pred_region
        %p690 = scmp.lt.s32.totalorder %s21, 1
        %s691 = scalar_select %p690, %s21, 1
        %p692 = scmp.lt.s32.totalorder %s22, 0
        %s693 = scalar_select %p692, %s22, 0
        %s694 = smul.addr %s691, 3
        %s695 = sadd.s32 %s693, %s694
        %s696 = smul.addr %s695, 8
        %s697 = scalar_lea.vmem %s4, %s696
      $region48: #{tpu_custom_call.1} parent=43 // pred_fallthru
        _
    $region44: #{tpu_custom_call.1} parent=5 // pred_fallthru
      _
  $region6: #{tpu_custom_call.1} parent=0 // loop_footer
    %s14 = sadd.s32 1, %s10
  $region7: #{tpu_custom_call.1} parent=0 // loop_footer_branch
    %9 = sbr.rel target = $region3
  $region8: #{tpu_custom_call.1} parent=0 // loop_exit
    _

</llo_original>
